<compile_context>
chip_gen: v7x
topology: tpu7x:2x2x1
jax: 0.10.0
libtpu: 0.0.40
codegen_flags: <defaults>
</compile_context>

<pallas_src>
import jax
import jax.numpy as jnp
from jax import lax
from jax.experimental import pallas as pl
from jax.experimental.pallas import tpu as pltpu


def make_packed_kernel(cfgs, L, tbl, negative_slope, eps):
    """Fast-path kernel: batch packed along lanes, one matmul per layer.

    Requires every layer to be a stride-1 'same-length' conv
    (2*pad == dil*(K-1)), so that every layer's activation is (C, TB*L).

    cfgs: tuple of (K, dil, pad, C_in, C_out) per layer (all static).
    Refs per grid step:
      x_ref : (1, C_in0, TB*L)            lane-dense input slab
      w_ref : (n, Co_max, KC_max) bf16    packed per-layer weights (C_out, K*C_in)
      gb_ref: (n-1, 2, Ch_max, 1) f32     packed LayerNorm gamma/beta (if n > 1)
      o_ref : (1, C_out_last, TB*L)       lane-dense output slab
    """
    n = len(cfgs)

    def kernel(*refs):
        if n > 1:
            x_ref, w_ref, gb_ref, o_ref = refs
        else:
            x_ref, w_ref, o_ref = refs
            gb_ref = None

        cur = x_ref[0].astype(jnp.float32)                 # (C_in0, TBL)
        w_all = w_ref[...]                                 # tiny, bf16
        gb_all = gb_ref[...] if gb_ref is not None else None

        # Position within each length-L batch slab (hoisted, shared by layers).
        lane = lax.broadcasted_iota(jnp.int32, (1, tbl), 1)
        lpos = lane % L
        masks = {}                                         # cached per offset

        for i, (K, dil, pad, C_in, C_out) in enumerate(cfgs):
            # ---- build the stacked-tap RHS (K*C_in, TBL) in registers ------
            pieces = []
            for k in range(K):
                o = k * dil - pad                          # source offset: l + o
                if o == 0:
                    pieces.append(cur)
                else:
                    shifted = pltpu.roll(cur, shift=(-o) % tbl, axis=1)
                    if o not in masks:
                        masks[o] = (lpos + o >= 0) & (lpos + o < L)
                    # zero = the conv's zero padding / slab-boundary guard
                    pieces.append(jnp.where(masks[o], shifted, 0.0))
            xstack = pieces[0] if K == 1 else jnp.concatenate(pieces, axis=0)

            # ---- single fused conv matmul (bf16 in, f32 accumulate) --------
            w_i = w_all[i, :C_out, :K * C_in]              # (C_out, K*C_in) bf16
            acc = jnp.dot(w_i, xstack.astype(w_i.dtype),
                          preferred_element_type=jnp.float32)   # (C_out, TBL)

            if i < n - 1:
                # ---- LayerNorm over channels (sublane axis) + LeakyReLU ----
                gamma = gb_all[i, 0, :C_out, :]            # (C_out, 1)
                beta = gb_all[i, 1, :C_out, :]
                mean = jnp.mean(acc, axis=0, keepdims=True)
                var = jnp.mean((acc - mean) ** 2, axis=0, keepdims=True)
                acc = (acc - mean) * lax.rsqrt(var + eps)
                acc = acc * gamma + beta
                cur = jnp.where(acc >= 0, acc, negative_slope * acc)
            else:
                o_ref[0] = acc.astype(o_ref.dtype)         # lane-dense store

    return kernel


def make_general_kernel(cfgs, negative_slope, eps):
    """Fallback: one batch element per grid step, arbitrary stride/pad/dilation.

    Padding is done at the value level (no VMEM scratch); K taps are still
    fused into one matmul per layer.
    cfgs: (K, s, pad, dil, L_in, L_out, C_in, C_out) per layer.
    """
    n = len(cfgs)

    def kernel(*refs):
        if n > 1:
            x_ref, w_ref, gb_ref, o_ref = refs
        else:
            x_ref, w_ref, o_ref = refs
            gb_ref = None

        cur = x_ref[0].astype(jnp.float32)                 # (C_in0, L0)
        w_all = w_ref[...]
        gb_all = gb_ref[...] if gb_ref is not None else None

        for i, (K, s, pad, dil, L_in, L_out, C_in, C_out) in enumerate(cfgs):
            if pad > 0:
                z = jnp.zeros((C_in, pad), jnp.float32)
                xp = jnp.concatenate([z, cur, z], axis=1)
            else:
                xp = cur
            pieces = []
            for k in range(K):
                start = k * dil
                if s == 1:
                    pieces.append(xp[:, start:start + L_out])
                else:
                    pieces.append(lax.slice(xp, (0, start),
                                            (C_in, start + (L_out - 1) * s + 1),
                                            (1, s)))
            xstack = pieces[0] if K == 1 else jnp.concatenate(pieces, axis=0)

            w_i = w_all[i, :C_out, :K * C_in]
            acc = jnp.dot(w_i, xstack.astype(w_i.dtype),
                          preferred_element_type=jnp.float32)

            if i < n - 1:
                gamma = gb_all[i, 0, :C_out, :]
                beta = gb_all[i, 1, :C_out, :]
                mean = jnp.mean(acc, axis=0, keepdims=True)
                var = jnp.mean((acc - mean) ** 2, axis=0, keepdims=True)
                acc = (acc - mean) * lax.rsqrt(var + eps)
                acc = acc * gamma + beta
                cur = jnp.where(acc >= 0, acc, negative_slope * acc)
            else:
                o_ref[0] = acc.astype(o_ref.dtype)

    return kernel


def stacked_conv1d_forward(params, x_ncl, *, strides, paddings, dilations,
                           negative_slope=0.01, eps=1e-5, tb=8):
    """Fused forward.  x_ncl: (B, dim_input, L) -> (B, dim_output, L_out)."""
    B, C_in0, L0 = x_ncl.shape
    n = len(params)

    # Static per-layer shape bookkeeping (PyTorch Conv1d output-length formula).
    cfgs = []
    L_cur, C_cur = L0, C_in0
    for i, p in enumerate(params):
        K, C_out, C_in = p["w"].shape
        assert C_in == C_cur, (C_in, C_cur)
        s, pd, d = strides[i], paddings[i], dilations[i]
        L_out = (L_cur + 2 * pd - d * (K - 1) - 1) // s + 1
        cfgs.append((K, s, pd, d, L_cur, L_out, C_in, C_out))
        L_cur, C_cur = L_out, C_out
    cfgs = tuple(cfgs)
    C_out_last, L_out_last = cfgs[-1][7], cfgs[-1][5]

    # ---- pack all conv weights into one bf16 array: (n, Co_max, KC_max) ----
    # W_packed[i, co, k*C_in + c] = w_i[k, co, c]  (matches the stacked-tap RHS)
    KC_max = max(c[0] * c[6] for c in cfgs)
    Co_max = max(c[7] for c in cfgs)
    w_packed = jnp.zeros((n, Co_max, KC_max), jnp.bfloat16)
    for i, p in enumerate(params):
        K, C_out, C_in = p["w"].shape
        w2 = jnp.transpose(p["w"], (1, 0, 2)).reshape(C_out, K * C_in)
        w_packed = w_packed.at[i, :C_out, :K * C_in].set(w2.astype(jnp.bfloat16))

    inputs_extra = [w_packed]
    specs_extra = [pl.BlockSpec(w_packed.shape, lambda b: (0, 0, 0))]

    # ---- pack all LayerNorm (gamma, beta) into one f32 array ---------------
    if n > 1:
        Ch_max = max(c[7] for c in cfgs[:-1])
        gb_packed = jnp.zeros((n - 1, 2, Ch_max, 1), jnp.float32)
        for i, p in enumerate(params[:-1]):
            co = p["gamma"].shape[0]
            gb_packed = gb_packed.at[i, 0, :co, 0].set(p["gamma"].astype(jnp.float32))
            gb_packed = gb_packed.at[i, 1, :co, 0].set(p["beta"].astype(jnp.float32))
        inputs_extra.append(gb_packed)
        specs_extra.append(pl.BlockSpec(gb_packed.shape, lambda b: (0, 0, 0, 0)))

    cparams = pltpu.CompilerParams(
        dimension_semantics=("parallel",),
        vmem_limit_bytes=32 * 1024 * 1024,   # safe on v5e/v6e and v7x (64 MiB phys)
    )

    # Fast path: every layer is a stride-1 'same-length' conv -> lane-packed batch.
    same_len = all(s == 1 and L_out == L_in
                   for (K, s, pd, d, L_in, L_out, ci, co) in cfgs)

    if same_len:
        # Keep >= 2 grid steps whenever B >= 2 (v7x has 2 TensorCores).
        tb = int(max(1, min(tb, pl.cdiv(B, 2))))
        nb = pl.cdiv(B, tb)
        Bp = nb * tb
        xb = x_ncl
        if Bp != B:
            xb = jnp.concatenate(
                [xb, jnp.zeros((Bp - B, C_in0, L0), xb.dtype)], axis=0)
        # (Bp, C, L) -> (nb, C, tb*L): lane-dense slab, slab-major along lanes.
        x_slab = (xb.reshape(nb, tb, C_in0, L0)
                    .transpose(0, 2, 1, 3)
                    .reshape(nb, C_in0, tb * L0))
        tbl = tb * L0

        fcfgs = tuple((c[0], c[3], c[2], c[6], c[7]) for c in cfgs)
        kernel = make_packed_kernel(fcfgs, L0, tbl,
                                    negative_slope=negative_slope, eps=eps)
        y_slab = pl.pallas_call(
            kernel,
            out_shape=jax.ShapeDtypeStruct((nb, C_out_last, tbl), x_ncl.dtype),
            grid=(nb,),
            in_specs=[pl.BlockSpec((1, C_in0, tbl), lambda b: (b, 0, 0))]
                     + specs_extra,
            out_specs=pl.BlockSpec((1, C_out_last, tbl), lambda b: (b, 0, 0)),
            compiler_params=cparams,
        )(x_slab, *inputs_extra)

        y = (y_slab.reshape(nb, C_out_last, tb, L_out_last)
                   .transpose(0, 2, 1, 3)
                   .reshape(Bp, C_out_last, L_out_last))[:B]
        return y

    # General fallback: one batch element per grid step.
    kernel = make_general_kernel(cfgs, negative_slope=negative_slope, eps=eps)
    return pl.pallas_call(
        kernel,
        out_shape=jax.ShapeDtypeStruct((B, C_out_last, L_out_last), x_ncl.dtype),
        grid=(B,),
        in_specs=[pl.BlockSpec((1, C_in0, L0), lambda b: (b, 0, 0))] + specs_extra,
        out_specs=pl.BlockSpec((1, C_out_last, L_out_last), lambda b: (b, 0, 0)),
        compiler_params=cparams,
    )(x_ncl, *inputs_extra)


def init_stacked_conv1d_params(key, num_layers, dim_input, dim_output,
                               dim_feature, kernel_size):
    """Deterministic xavier-normal-style init; random LN affine to exercise it."""
    dims = [dim_input] + [dim_feature] * (num_layers - 1) + [dim_output]
    params = []
    for i in range(num_layers):
        c_in, c_out = dims[i], dims[i + 1]
        key, wk, gk, bk = jax.random.split(key, 4)
        fan_in, fan_out = c_in * kernel_size, c_out * kernel_size
        std = (2.0 / (fan_in + fan_out)) ** 0.5           # xavier_normal, gain=1
        w = std * jax.random.normal(wk, (kernel_size, c_out, c_in), jnp.float32)
        params.append(dict(
            w=w,                                          # (K, C_out, C_in)
            gamma=1.0 + 0.1 * jax.random.normal(gk, (c_out,), jnp.float32),
            beta=0.1 * jax.random.normal(bk, (c_out,), jnp.float32),
        ))
    return params


def _reference_forward(params, x_ncl, *, strides, paddings, dilations,
                       eps=1e-5, negative_slope=0.01):
    """Pure-JAX reference matching PyTorch semantics (sanity check)."""
    x = x_ncl
    n = len(params)
    for i, p in enumerate(params):
        w_oik = jnp.transpose(p["w"], (1, 2, 0))          # (K,Co,Ci) -> (Co,Ci,K)
        x = lax.conv_general_dilated(
            x, w_oik, window_strides=(strides[i],),
            padding=[(paddings[i], paddings[i])],
            rhs_dilation=(dilations[i],),
            dimension_numbers=("NCH", "OIH", "NCH"),
            precision=lax.Precision.HIGHEST)
        if i < n - 1:
            mean = jnp.mean(x, axis=1, keepdims=True)
            var = jnp.mean((x - mean) ** 2, axis=1, keepdims=True)
            xn = (x - mean) * lax.rsqrt(var + eps)
            xn = xn * p["gamma"][None, :, None] + p["beta"][None, :, None]
            x = jnp.where(xn >= 0, xn, negative_slope * xn)
    return x


if __name__ == "__main__":
    # Module hyper-parameters (defaults of the PyTorch module, small shapes).
    num_layers = 3
    dim_input, dim_features, dim_output = 8, 16, 8
    kernel_size, stride, padding, dilation = 3, 1, 1, 1
    # B=16, L=16: with TB=8 the packed lane width is exactly 128 and the grid
    # has 2 parallel steps (both TensorCores busy on v7x).
    B, L = 16, 16

    key = jax.random.PRNGKey(0)
    pkey, xkey = jax.random.split(key)
    params = init_stacked_conv1d_params(pkey, num_layers, dim_input, dim_output,
                                        dim_features, kernel_size)
    x = jax.random.normal(xkey, (B, dim_input, L), jnp.float32)  # (B, C, L) NCL

    strides = [stride] * num_layers
    paddings = [padding] * num_layers
    dilations = [dilation] * num_layers

    y = stacked_conv1d_forward(params, x, strides=strides, paddings=paddings,
                               dilations=dilations, tb=8)
    y = jax.block_until_ready(y)

    y_ref = _reference_forward(params, x, strides=strides, paddings=paddings,
                               dilations=dilations)
    assert y.shape == y_ref.shape, (y.shape, y_ref.shape)
    # Kernel uses bf16 MXU operands (f32 accumulation); reference is f32 at
    # Precision.HIGHEST, so the tolerance is set for bf16-input matmuls.
    err = float(jnp.max(jnp.abs(y - y_ref)))
    assert jnp.allclose(y, y_ref, atol=3e-2, rtol=3e-2), err
    print("KERNEL_OK")
</pallas_src>

<mosaic_0001>
module attributes {stable_mosaic.version = 11 : i64} {
  func.func @kernel(%arg0: i32, %arg1: memref<1x8x128xf32, #tpu.memory_space<vmem>>, %arg2: memref<3x16x48xbf16, #tpu.memory_space<vmem>>, %arg3: memref<2x2x16x1xf32, #tpu.memory_space<vmem>>, %arg4: memref<1x8x128xf32, #tpu.memory_space<vmem>>) attributes {dimension_semantics = [#tpu.dimension_semantics<parallel>], iteration_bounds = array<i64: 2>, scalar_prefetch = 0 : i64, scratch_operands = 0 : i64, tpu.core_type = #tpu.core_type<tc>, window_params = [{transform_indices = @transform_0, window_bounds = array<i64: 1, 8, 128>}, {pipeline_mode = #tpu.pipeline_mode<synchronous>, transform_indices = @transform_1, window_bounds = array<i64: 3, 16, 48>}, {pipeline_mode = #tpu.pipeline_mode<synchronous>, transform_indices = @transform_2, window_bounds = array<i64: 2, 2, 16, 1>}, {transform_indices = @transform_3, window_bounds = array<i64: 1, 8, 128>}]} {
    %c0 = arith.constant 0 : index
    %c0_0 = arith.constant 0 : index
    %c0_1 = arith.constant 0 : index
    %0 = vector.load %arg1[%c0, %c0_0, %c0_1] : memref<1x8x128xf32, #tpu.memory_space<vmem>>, vector<1x8x128xf32>
    %1 = vector.shape_cast %0 : vector<1x8x128xf32> to vector<8x128xf32>
    %c0_2 = arith.constant 0 : index
    %c0_3 = arith.constant 0 : index
    %c0_4 = arith.constant 0 : index
    %2 = vector.load %arg2[%c0_2, %c0_3, %c0_4] : memref<3x16x48xbf16, #tpu.memory_space<vmem>>, vector<3x16x48xbf16>
    %c0_5 = arith.constant 0 : index
    %c0_6 = arith.constant 0 : index
    %c0_7 = arith.constant 0 : index
    %c0_8 = arith.constant 0 : index
    %3 = vector.load %arg3[%c0_5, %c0_6, %c0_7, %c0_8] : memref<2x2x16x1xf32, #tpu.memory_space<vmem>>, vector<2x2x16x1xf32>
    %4 = tpu.iota {dimensions = array<i32: 1>} : vector<1x128xi32>
    %c16_i32 = arith.constant 16 : i32
    %c0_i32 = arith.constant 0 : i32
    %5 = arith.cmpi eq, %c16_i32, %c0_i32 : i32
    %c1_i32 = arith.constant 1 : i32
    %6 = arith.select %5, %c1_i32, %c16_i32 : i32
    %7 = vector.broadcast %6 : i32 to vector<1x128xi32>
    %8 = arith.remsi %4, %7 : vector<1x128xi32>
    %c0_i32_9 = arith.constant 0 : i32
    %9 = vector.broadcast %c0_i32_9 : i32 to vector<1x128xi32>
    %10 = arith.cmpi ne, %8, %9 : vector<1x128xi32>
    %c0_i32_10 = arith.constant 0 : i32
    %11 = vector.broadcast %c0_i32_10 : i32 to vector<1x128xi32>
    %12 = arith.cmpi slt, %8, %11 : vector<1x128xi32>
    %c0_i32_11 = arith.constant 0 : i32
    %13 = arith.cmpi slt, %6, %c0_i32_11 : i32
    %14 = vector.broadcast %13 : i1 to vector<1x128xi1>
    %15 = vector.broadcast %14 : vector<1x128xi1> to vector<1x128xi1>
    %16 = arith.xori %12, %15 : vector<1x128xi1>
    %17 = arith.andi %16, %10 : vector<1x128xi1>
    %18 = vector.broadcast %6 : i32 to vector<1x128xi32>
    %19 = arith.addi %8, %18 : vector<1x128xi32>
    %20 = arith.select %17, %19, %8 : vector<1x128xi1>, vector<1x128xi32>
    %c1_i32_12 = arith.constant 1 : i32
    %21 = tpu.dynamic_rotate %1 by %c1_i32_12 dim 1 : vector<8x128xf32>, i32 -> vector<8x128xf32>
    %c-1_i32 = arith.constant -1 : i32
    %22 = vector.broadcast %c-1_i32 : i32 to vector<1x128xi32>
    %23 = arith.addi %20, %22 : vector<1x128xi32>
    %c0_i32_13 = arith.constant 0 : i32
    %24 = vector.broadcast %c0_i32_13 : i32 to vector<1x128xi32>
    %25 = arith.cmpi sge, %23, %24 : vector<1x128xi32>
    %c-1_i32_14 = arith.constant -1 : i32
    %26 = vector.broadcast %c-1_i32_14 : i32 to vector<1x128xi32>
    %27 = arith.addi %20, %26 : vector<1x128xi32>
    %c16_i32_15 = arith.constant 16 : i32
    %28 = vector.broadcast %c16_i32_15 : i32 to vector<1x128xi32>
    %29 = arith.cmpi slt, %27, %28 : vector<1x128xi32>
    %30 = arith.andi %25, %29 : vector<1x128xi1>
    %cst = arith.constant 0.000000e+00 : f32
    %31 = vector.shape_cast %30 : vector<1x128xi1> to vector<1x128xi1>
    %32 = vector.broadcast %31 : vector<1x128xi1> to vector<8x128xi1>
    %33 = vector.broadcast %cst : f32 to vector<8x128xf32>
    %34 = arith.select %32, %21, %33 : vector<8x128xi1>, vector<8x128xf32>
    %c127_i32 = arith.constant 127 : i32
    %35 = tpu.dynamic_rotate %1 by %c127_i32 dim 1 : vector<8x128xf32>, i32 -> vector<8x128xf32>
    %c1_i32_16 = arith.constant 1 : i32
    %36 = vector.broadcast %c1_i32_16 : i32 to vector<1x128xi32>
    %37 = arith.addi %20, %36 : vector<1x128xi32>
    %c0_i32_17 = arith.constant 0 : i32
    %38 = vector.broadcast %c0_i32_17 : i32 to vector<1x128xi32>
    %39 = arith.cmpi sge, %37, %38 : vector<1x128xi32>
    %c1_i32_18 = arith.constant 1 : i32
    %40 = vector.broadcast %c1_i32_18 : i32 to vector<1x128xi32>
    %41 = arith.addi %20, %40 : vector<1x128xi32>
    %c16_i32_19 = arith.constant 16 : i32
    %42 = vector.broadcast %c16_i32_19 : i32 to vector<1x128xi32>
    %43 = arith.cmpi slt, %41, %42 : vector<1x128xi32>
    %44 = arith.andi %39, %43 : vector<1x128xi1>
    %cst_20 = arith.constant 0.000000e+00 : f32
    %45 = vector.shape_cast %44 : vector<1x128xi1> to vector<1x128xi1>
    %46 = vector.broadcast %45 : vector<1x128xi1> to vector<8x128xi1>
    %47 = vector.broadcast %cst_20 : f32 to vector<8x128xf32>
    %48 = arith.select %46, %35, %47 : vector<8x128xi1>, vector<8x128xf32>
    %49 = tpu.concatenate %34, %1, %48 in 0 : vector<8x128xf32>, vector<8x128xf32>, vector<8x128xf32> -> vector<24x128xf32>
    %50 = vector.extract_strided_slice %2 {offsets = [0, 0, 0], sizes = [1, 16, 24], strides = [1, 1, 1]} : vector<3x16x48xbf16> to vector<1x16x24xbf16>
    %51 = vector.shape_cast %50 : vector<1x16x24xbf16> to vector<16x24xbf16>
    %52 = arith.truncf %49 : vector<24x128xf32> to vector<24x128xbf16>
    %cst_21 = arith.constant dense<0.000000e+00> : vector<16x128xf32>
    %53 = tpu.matmul %51, %52, %cst_21 {dimension_numbers = #tpu.dot_dimension_numbers<[1], [0], [0], [1], [0, 0, 1, 1], [], []>} : vector<16x24xbf16>, vector<24x128xbf16>, vector<16x128xf32> -> vector<16x128xf32>
    %54 = vector.extract_strided_slice %3 {offsets = [0, 0, 0, 0], sizes = [1, 1, 16, 1], strides = [1, 1, 1, 1]} : vector<2x2x16x1xf32> to vector<1x1x16x1xf32>
    %55 = vector.shape_cast %54 : vector<1x1x16x1xf32> to vector<16x1xf32>
    %56 = vector.extract_strided_slice %3 {offsets = [0, 1, 0, 0], sizes = [1, 1, 16, 1], strides = [1, 1, 1, 1]} : vector<2x2x16x1xf32> to vector<1x1x16x1xf32>
    %57 = vector.shape_cast %56 : vector<1x1x16x1xf32> to vector<16x1xf32>
    %cst_22 = arith.constant dense<0.000000e+00> : vector<128xf32>
    %58 = vector.multi_reduction <add>, %53, %cst_22 [0] : vector<16x128xf32> to vector<128xf32>
    %59 = vector.shape_cast %58 : vector<128xf32> to vector<1x128xf32>
    %cst_23 = arith.constant 1.600000e+01 : f32
    %60 = vector.broadcast %cst_23 : f32 to vector<1x128xf32>
    %61 = arith.divf %59, %60 : vector<1x128xf32>
    %62 = vector.broadcast %61 : vector<1x128xf32> to vector<16x128xf32>
    %63 = arith.subf %53, %62 : vector<16x128xf32>
    %64 = arith.mulf %63, %63 : vector<16x128xf32>
    %cst_24 = arith.constant dense<0.000000e+00> : vector<128xf32>
    %65 = vector.multi_reduction <add>, %64, %cst_24 [0] : vector<16x128xf32> to vector<128xf32>
    %66 = vector.shape_cast %65 : vector<128xf32> to vector<1x128xf32>
    %cst_25 = arith.constant 1.600000e+01 : f32
    %67 = vector.broadcast %cst_25 : f32 to vector<1x128xf32>
    %68 = arith.divf %66, %67 : vector<1x128xf32>
    %69 = vector.broadcast %61 : vector<1x128xf32> to vector<16x128xf32>
    %70 = arith.subf %53, %69 : vector<16x128xf32>
    %cst_26 = arith.constant 9.99999974E-6 : f32
    %71 = vector.broadcast %cst_26 : f32 to vector<1x128xf32>
    %72 = arith.addf %68, %71 : vector<1x128xf32>
    %73 = math.rsqrt %72 : vector<1x128xf32>
    %74 = vector.broadcast %73 : vector<1x128xf32> to vector<16x128xf32>
    %75 = arith.mulf %70, %74 : vector<16x128xf32>
    %76 = vector.broadcast %55 : vector<16x1xf32> to vector<16x128xf32>
    %77 = arith.mulf %75, %76 : vector<16x128xf32>
    %78 = vector.broadcast %57 : vector<16x1xf32> to vector<16x128xf32>
    %79 = arith.addf %77, %78 : vector<16x128xf32>
    %cst_27 = arith.constant 0.000000e+00 : f32
    %80 = vector.broadcast %cst_27 : f32 to vector<16x128xf32>
    %81 = arith.cmpf oge, %79, %80 : vector<16x128xf32>
    %cst_28 = arith.constant 0.00999999977 : f32
    %82 = vector.broadcast %cst_28 : f32 to vector<16x128xf32>
    %83 = arith.mulf %82, %79 : vector<16x128xf32>
    %84 = arith.select %81, %79, %83 : vector<16x128xi1>, vector<16x128xf32>
    %c1_i32_29 = arith.constant 1 : i32
    %85 = tpu.dynamic_rotate %84 by %c1_i32_29 dim 1 : vector<16x128xf32>, i32 -> vector<16x128xf32>
    %cst_30 = arith.constant 0.000000e+00 : f32
    %86 = vector.shape_cast %30 : vector<1x128xi1> to vector<1x128xi1>
    %87 = vector.broadcast %86 : vector<1x128xi1> to vector<16x128xi1>
    %88 = vector.broadcast %cst_30 : f32 to vector<16x128xf32>
    %89 = arith.select %87, %85, %88 : vector<16x128xi1>, vector<16x128xf32>
    %c127_i32_31 = arith.constant 127 : i32
    %90 = tpu.dynamic_rotate %84 by %c127_i32_31 dim 1 : vector<16x128xf32>, i32 -> vector<16x128xf32>
    %cst_32 = arith.constant 0.000000e+00 : f32
    %91 = vector.shape_cast %44 : vector<1x128xi1> to vector<1x128xi1>
    %92 = vector.broadcast %91 : vector<1x128xi1> to vector<16x128xi1>
    %93 = vector.broadcast %cst_32 : f32 to vector<16x128xf32>
    %94 = arith.select %92, %90, %93 : vector<16x128xi1>, vector<16x128xf32>
    %95 = tpu.concatenate %89, %84, %94 in 0 : vector<16x128xf32>, vector<16x128xf32>, vector<16x128xf32> -> vector<48x128xf32>
    %96 = vector.extract_strided_slice %2 {offsets = [1, 0, 0], sizes = [1, 16, 48], strides = [1, 1, 1]} : vector<3x16x48xbf16> to vector<1x16x48xbf16>
    %97 = vector.shape_cast %96 : vector<1x16x48xbf16> to vector<16x48xbf16>
    %98 = arith.truncf %95 : vector<48x128xf32> to vector<48x128xbf16>
    %cst_33 = arith.constant dense<0.000000e+00> : vector<16x128xf32>
    %99 = tpu.matmul %97, %98, %cst_33 {dimension_numbers = #tpu.dot_dimension_numbers<[1], [0], [0], [1], [0, 0, 1, 1], [], []>} : vector<16x48xbf16>, vector<48x128xbf16>, vector<16x128xf32> -> vector<16x128xf32>
    %100 = vector.extract_strided_slice %3 {offsets = [1, 0, 0, 0], sizes = [1, 1, 16, 1], strides = [1, 1, 1, 1]} : vector<2x2x16x1xf32> to vector<1x1x16x1xf32>
    %101 = vector.shape_cast %100 : vector<1x1x16x1xf32> to vector<16x1xf32>
    %102 = vector.extract_strided_slice %3 {offsets = [1, 1, 0, 0], sizes = [1, 1, 16, 1], strides = [1, 1, 1, 1]} : vector<2x2x16x1xf32> to vector<1x1x16x1xf32>
    %103 = vector.shape_cast %102 : vector<1x1x16x1xf32> to vector<16x1xf32>
    %cst_34 = arith.constant dense<0.000000e+00> : vector<128xf32>
    %104 = vector.multi_reduction <add>, %99, %cst_34 [0] : vector<16x128xf32> to vector<128xf32>
    %105 = vector.shape_cast %104 : vector<128xf32> to vector<1x128xf32>
    %cst_35 = arith.constant 1.600000e+01 : f32
    %106 = vector.broadcast %cst_35 : f32 to vector<1x128xf32>
    %107 = arith.divf %105, %106 : vector<1x128xf32>
    %108 = vector.broadcast %107 : vector<1x128xf32> to vector<16x128xf32>
    %109 = arith.subf %99, %108 : vector<16x128xf32>
    %110 = arith.mulf %109, %109 : vector<16x128xf32>
    %cst_36 = arith.constant dense<0.000000e+00> : vector<128xf32>
    %111 = vector.multi_reduction <add>, %110, %cst_36 [0] : vector<16x128xf32> to vector<128xf32>
    %112 = vector.shape_cast %111 : vector<128xf32> to vector<1x128xf32>
    %cst_37 = arith.constant 1.600000e+01 : f32
    %113 = vector.broadcast %cst_37 : f32 to vector<1x128xf32>
    %114 = arith.divf %112, %113 : vector<1x128xf32>
    %115 = vector.broadcast %107 : vector<1x128xf32> to vector<16x128xf32>
    %116 = arith.subf %99, %115 : vector<16x128xf32>
    %cst_38 = arith.constant 9.99999974E-6 : f32
    %117 = vector.broadcast %cst_38 : f32 to vector<1x128xf32>
    %118 = arith.addf %114, %117 : vector<1x128xf32>
    %119 = math.rsqrt %118 : vector<1x128xf32>
    %120 = vector.broadcast %119 : vector<1x128xf32> to vector<16x128xf32>
    %121 = arith.mulf %116, %120 : vector<16x128xf32>
    %122 = vector.broadcast %101 : vector<16x1xf32> to vector<16x128xf32>
    %123 = arith.mulf %121, %122 : vector<16x128xf32>
    %124 = vector.broadcast %103 : vector<16x1xf32> to vector<16x128xf32>
    %125 = arith.addf %123, %124 : vector<16x128xf32>
    %cst_39 = arith.constant 0.000000e+00 : f32
    %126 = vector.broadcast %cst_39 : f32 to vector<16x128xf32>
    %127 = arith.cmpf oge, %125, %126 : vector<16x128xf32>
    %cst_40 = arith.constant 0.00999999977 : f32
    %128 = vector.broadcast %cst_40 : f32 to vector<16x128xf32>
    %129 = arith.mulf %128, %125 : vector<16x128xf32>
    %130 = arith.select %127, %125, %129 : vector<16x128xi1>, vector<16x128xf32>
    %c1_i32_41 = arith.constant 1 : i32
    %131 = tpu.dynamic_rotate %130 by %c1_i32_41 dim 1 : vector<16x128xf32>, i32 -> vector<16x128xf32>
    %cst_42 = arith.constant 0.000000e+00 : f32
    %132 = vector.shape_cast %30 : vector<1x128xi1> to vector<1x128xi1>
    %133 = vector.broadcast %132 : vector<1x128xi1> to vector<16x128xi1>
    %134 = vector.broadcast %cst_42 : f32 to vector<16x128xf32>
    %135 = arith.select %133, %131, %134 : vector<16x128xi1>, vector<16x128xf32>
    %c127_i32_43 = arith.constant 127 : i32
    %136 = tpu.dynamic_rotate %130 by %c127_i32_43 dim 1 : vector<16x128xf32>, i32 -> vector<16x128xf32>
    %cst_44 = arith.constant 0.000000e+00 : f32
    %137 = vector.shape_cast %44 : vector<1x128xi1> to vector<1x128xi1>
    %138 = vector.broadcast %137 : vector<1x128xi1> to vector<16x128xi1>
    %139 = vector.broadcast %cst_44 : f32 to vector<16x128xf32>
    %140 = arith.select %138, %136, %139 : vector<16x128xi1>, vector<16x128xf32>
    %141 = tpu.concatenate %135, %130, %140 in 0 : vector<16x128xf32>, vector<16x128xf32>, vector<16x128xf32> -> vector<48x128xf32>
    %142 = vector.extract_strided_slice %2 {offsets = [2, 0, 0], sizes = [1, 8, 48], strides = [1, 1, 1]} : vector<3x16x48xbf16> to vector<1x8x48xbf16>
    %143 = vector.shape_cast %142 : vector<1x8x48xbf16> to vector<8x48xbf16>
    %144 = arith.truncf %141 : vector<48x128xf32> to vector<48x128xbf16>
    %cst_45 = arith.constant dense<0.000000e+00> : vector<8x128xf32>
    %145 = tpu.matmul %143, %144, %cst_45 {dimension_numbers = #tpu.dot_dimension_numbers<[1], [0], [0], [1], [0, 0, 1, 1], [], []>} : vector<8x48xbf16>, vector<48x128xbf16>, vector<8x128xf32> -> vector<8x128xf32>
    %c0_46 = arith.constant 0 : index
    %c0_47 = arith.constant 0 : index
    %c0_48 = arith.constant 0 : index
    %146 = vector.load %arg4[%c0_46, %c0_47, %c0_48] : memref<1x8x128xf32, #tpu.memory_space<vmem>>, vector<1x8x128xf32>
    %147 = vector.shape_cast %146 : vector<1x8x128xf32> to vector<8x128xf32>
    %148 = vector.shape_cast %145 : vector<8x128xf32> to vector<1x8x128xf32>
    tpu.vector_store %arg4[%c0_46, %c0_47, %c0_48], %148 {strides = array<i32>} : memref<1x8x128xf32, #tpu.memory_space<vmem>>, vector<1x8x128xf32>,
    return
  }
  func.func @transform_0(%arg0: i32) -> (i32, i32, i32) {
    %c0_i32 = arith.constant 0 : i32
    %c0_i32_0 = arith.constant 0 : i32
    %c0_i32_1 = arith.constant 0 : i32
    return %arg0, %c0_i32, %c0_i32_0 : i32, i32, i32
  }
  func.func @transform_1(%arg0: i32) -> (i32, i32, i32) {
    %c0_i32 = arith.constant 0 : i32
    %c0_i32_0 = arith.constant 0 : i32
    %c0_i32_1 = arith.constant 0 : i32
    %c0_i32_2 = arith.constant 0 : i32
    return %c0_i32, %c0_i32_0, %c0_i32_1 : i32, i32, i32
  }
  func.func @transform_2(%arg0: i32) -> (i32, i32, i32, i32) {
    %c0_i32 = arith.constant 0 : i32
    %c0_i32_0 = arith.constant 0 : i32
    %c0_i32_1 = arith.constant 0 : i32
    %c0_i32_2 = arith.constant 0 : i32
    %c0_i32_3 = arith.constant 0 : i32
    return %c0_i32, %c0_i32_0, %c0_i32_1, %c0_i32_2 : i32, i32, i32, i32
  }
  func.func @transform_3(%arg0: i32) -> (i32, i32, i32) {
    %c0_i32 = arith.constant 0 : i32
    %c0_i32_0 = arith.constant 0 : i32
    %c0_i32_1 = arith.constant 0 : i32
    return %arg0, %c0_i32, %c0_i32_0 : i32, i32, i32
  }
}

</mosaic_0001>

<llo_original>
// kernel: tpu_custom_call.1
$region0: #{tpu_custom_call.1}
  #allocation0 [shape = 'u32[]', space=smem, size = 0x4, offset = 0x4, fixed_abs, tag = 'smem constant byte address 0x4 - core index']
  #allocation1 [shape = 'u32[144,128]{1,0:T(1,128)}', space=vmem, size = 0x12000, scoped, tag = 'internal scratch']
  %s0 = inlined_call_operand.vmem [shape: f32[2,8,128], index: 0, kind: input, shape index: {}]
  %s1 = inlined_call_operand.vmem [shape: bf16[3,16,48], index: 1, kind: input, shape index: {}]
  %s2 = inlined_call_operand.vmem [shape: f32[2,2,16,1], index: 2, kind: input, shape index: {}]
  %s3 = inlined_call_operand.hbm [shape: f32[2,8,128], index: 3, kind: output, shape index: {}]
  %s4 = sld [smem:[#allocation0]]
  $region45: #{tpu_custom_call.1} parent=0
    _
  %s6 = ssub.s32 1, %s4
  %s7 = scalar_select 0, %s6, %s4
  $region1: #{tpu_custom_call.1} parent=0
    #allocation2 [shape = 'u8[8192]{0}', space=vmem, size = 0x2000, scoped, tag = 'output window, operand 0']
    #allocation3 [shape = 's32[2]{0}', space=sflag, size = 0x8, scoped, tag = 'scoped memory for tpu_custom_call.1']
    %8 = vsyncpa [#allocation3], 0
    %s9 = scalar_lea.sflag [#allocation3], 1
    %10 = vsyncpa %s9, 0
    loop: start=0, step=1, limit=4
    $region2: #{tpu_custom_call.1} parent=1 // loop_pre_header
      _
    $region3: #{tpu_custom_call.1} parent=1 // loop_header
      %s12 = sphi 0, %s16
      %p13 = scmp.ge.s32.totalorder %s12, 4
      %s22 = sphi 0, %s24
      %s25 = sphi 0, %s22
      %s26 = sphi 0, %s25
      %s42 = sphi 0, %s26
      %s46 = sphi 0, %s46
      %s48 = sphi 0, %s46
      %s49 = sphi 0, %s48
      %s63 = sphi 0, %s49
      %s67 = sphi 0, %s67
      %s69 = sphi 0, %s67
      %s70 = sphi 0, %s69
      %s84 = sphi 0, %s70
      %s90 = sphi 0, %s92
      %s93 = sphi 0, %s90
      %s94 = sphi 0, %s93
      %s110 = sphi 0, %s94
    $region4: #{tpu_custom_call.1} parent=1 // loop_header_branch
      %15 = sbr.rel (%p13) target = $region8
    $region5: #{tpu_custom_call.1} parent=1 // loop_body
      %s17 = ssub.s32 %s12, 1
      %s18 = ssub.s32 %s12, 2
      %s19 = sadd.s32 %s12, 1
      %s20 = ssub.s32 %s12, %s19
      %p21 = scmp.eq.s32.totalorder %s20, 0
      %s23 = sadd.s32 %s22, 1
      %s24 = scalar_select %p21, %s22, %s23
      %p27 = pneg %p21
      %p28 = scmp.eq.s32.totalorder %s12, 1
      %p29 = por %p27, %p28
      %p30 = scmp.ne.s32.totalorder %s22, %s25
      %p31 = scmp.eq.s32.totalorder %s12, 0
      %p32 = por %p30, %p31
      %p33 = scmp.ne.s32.totalorder %s22, %s25
      %p34 = scmp.eq.s32.totalorder %s17, 1
      %p35 = por %p33, %p34
      %p36 = scmp.ne.s32.totalorder %s25, %s26
      %p37 = scmp.eq.s32.totalorder %s17, 0
      %p38 = por %p36, %p37
      %p39 = scmp.ne.s32.totalorder %s25, %s26
      %p40 = scmp.eq.s32.totalorder %s18, 1
      %p41 = por %p39, %p40
      %p43 = scmp.ne.s32.totalorder %s26, %s42
      %p44 = scmp.eq.s32.totalorder %s18, 0
      %p45 = por %p43, %p44
      %s47 = sadd.s32 %s46, 1
      %p50 = scmp.eq.s32.totalorder %s12, 1
      %p51 = scmp.ne.s32.totalorder %s46, %s48
      %p52 = scmp.eq.s32.totalorder %s12, 0
      %p53 = por %p51, %p52
      %p54 = scmp.ne.s32.totalorder %s46, %s48
      %p55 = scmp.eq.s32.totalorder %s17, 1
      %p56 = por %p54, %p55
      %p57 = scmp.ne.s32.totalorder %s48, %s49
      %p58 = scmp.eq.s32.totalorder %s17, 0
      %p59 = por %p57, %p58
      %p60 = scmp.ne.s32.totalorder %s48, %s49
      %p61 = scmp.eq.s32.totalorder %s18, 1
      %p62 = por %p60, %p61
      %p64 = scmp.ne.s32.totalorder %s49, %s63
      %p65 = scmp.eq.s32.totalorder %s18, 0
      %p66 = por %p64, %p65
      %s68 = sadd.s32 %s67, 1
      %p71 = scmp.eq.s32.totalorder %s12, 1
      %p72 = scmp.ne.s32.totalorder %s67, %s69
      %p73 = scmp.eq.s32.totalorder %s12, 0
      %p74 = por %p72, %p73
      %p75 = scmp.ne.s32.totalorder %s67, %s69
      %p76 = scmp.eq.s32.totalorder %s17, 1
      %p77 = por %p75, %p76
      %p78 = scmp.ne.s32.totalorder %s69, %s70
      %p79 = scmp.eq.s32.totalorder %s17, 0
      %p80 = por %p78, %p79
      %p81 = scmp.ne.s32.totalorder %s69, %s70
      %p82 = scmp.eq.s32.totalorder %s18, 1
      %p83 = por %p81, %p82
      %p85 = scmp.ne.s32.totalorder %s70, %s84
      %p86 = scmp.eq.s32.totalorder %s18, 0
      %p87 = por %p85, %p86
      %s88 = ssub.s32 %s12, %s19
      %p89 = scmp.eq.s32.totalorder %s88, 0
      %s91 = sadd.s32 %s90, 1
      %s92 = scalar_select %p89, %s90, %s91
      %p95 = pneg %p89
      %p96 = scmp.eq.s32.totalorder %s12, 1
      %p97 = por %p95, %p96
      %p98 = scmp.ne.s32.totalorder %s90, %s93
      %p99 = scmp.eq.s32.totalorder %s12, 0
      %p100 = por %p98, %p99
      %p101 = scmp.ne.s32.totalorder %s90, %s93
      %p102 = scmp.eq.s32.totalorder %s17, 1
      %p103 = por %p101, %p102
      %p104 = scmp.ne.s32.totalorder %s93, %s94
      %p105 = scmp.eq.s32.totalorder %s17, 0
      %p106 = por %p104, %p105
      %p107 = scmp.ne.s32.totalorder %s93, %s94
      %p108 = scmp.eq.s32.totalorder %s18, 1
      %p109 = por %p107, %p108
      %p111 = scmp.ne.s32.totalorder %s94, %s110
      %p112 = scmp.eq.s32.totalorder %s18, 0
      %p113 = por %p111, %p112
      %p114 = scmp.le.s32.totalorder 1, %s12
      %p115 = scmp.lt.s32.totalorder %s12, 3
      %p116 = pnand %p114, %p115
      %p117 = pneg %p116
      // Predicated region
      $region9: #{tpu_custom_call.1} parent=5 // pred_check
        _
      $region10: #{tpu_custom_call.1} parent=5 // pred_check_branch
        %119 = sbr.rel (%p116) target = $region12
      $region11: #{tpu_custom_call.1} parent=5 // pred_region
        %s120 = ssub.s32 %s12, 1
        // Predicated region
        $region13: #{tpu_custom_call.1} parent=11 // pred_check
          %p121 = pneg %p59
        $region14: #{tpu_custom_call.1} parent=11 // pred_check_branch
          %123 = sbr.rel (%p121) target = $region16
        $region15: #{tpu_custom_call.1} parent=11 // pred_region
          _
        $region16: #{tpu_custom_call.1} parent=11 // pred_fallthru
          _
        // Predicated region
        $region17: #{tpu_custom_call.1} parent=11 // pred_check
          %p124 = pneg %p80
        $region18: #{tpu_custom_call.1} parent=11 // pred_check_branch
          %126 = sbr.rel (%p124) target = $region20
        $region19: #{tpu_custom_call.1} parent=11 // pred_region
          _
        $region20: #{tpu_custom_call.1} parent=11 // pred_fallthru
          _
      $region12: #{tpu_custom_call.1} parent=5 // pred_fallthru
        _
      %p127 = scmp.lt.s32.totalorder %s12, 2
      // Predicated region
      $region21: #{tpu_custom_call.1} parent=5 // pred_check
        %p128 = pneg %p127
      $region22: #{tpu_custom_call.1} parent=5 // pred_check_branch
        %130 = sbr.rel (%p128) target = $region24
      $region23: #{tpu_custom_call.1} parent=5 // pred_region
        // Predicated region
        $region25: #{tpu_custom_call.1} parent=23 // pred_check
          %p131 = pneg %p32
        $region26: #{tpu_custom_call.1} parent=23 // pred_check_branch
          %133 = sbr.rel (%p131) target = $region28
        $region27: #{tpu_custom_call.1} parent=23 // pred_region
          %p134 = scmp.lt.s32.totalorder %s12, 1
          %s135 = scalar_select %p134, %s12, 1
          %s136 = smul.addr %s135, 8
          %s137 = scalar_lea.vmem %s0, %s136
        $region28: #{tpu_custom_call.1} parent=23 // pred_fallthru
          _
      $region24: #{tpu_custom_call.1} parent=5 // pred_fallthru
        _
      %p138 = scmp.le.s32.totalorder 1, %s12
      %p139 = scmp.lt.s32.totalorder %s12, 3
      %p140 = pnand %p138, %p139
      %p141 = pneg %p140
      // Predicated region
      $region29: #{tpu_custom_call.1} parent=5 // pred_check
        _
      $region30: #{tpu_custom_call.1} parent=5 // pred_check_branch
        %143 = sbr.rel (%p140) target = $region32
      $region31: #{tpu_custom_call.1} parent=5 // pred_region
        %s144 = ssub.s32 %s12, 1
        %p145 = scmp.lt.s32.totalorder %s17, 1
        %s146 = scalar_select %p145, %s17, 1
        %s147 = smul.addr %s146, 8
        %s148 = scalar_lea.vmem %s0, %s147
        %p149 = pneg %p38
        %p150 = pneg %p35
        %p151 = pneg %p59
        %p152 = pneg %p56
        %p153 = pneg %p80
        %p154 = pneg %p77
        %p155 = pneg %p106
        %p156 = pneg %p103
        %s157 = sand.u32 %s93, 1
        %s158 = scalar_lea.sflag [#allocation3], %s157
        %s159 = sand.u32 %s93, 1
        %s160 = smul.addr %s159, 8
        %s161 = scalar_lea.vmem [#allocation2], %s160
        %p162 = scmp.lt.s32.totalorder %s17, 1
        %s163 = scalar_select %p162, %s17, 1
        %s164 = smul.addr %s163, 8
        %s165 = scalar_lea.vmem %s0, %s164
        %v167 = vld [vmem:[%s165] sm:$0xff]
        %v168 = vld [vmem:[%s1] sm:$0xf]
        %v169 = vld [vmem:[%s1 + $0x4] sm:$0xf]
        %v170 = vld [vmem:[%s1 + $0x8] sm:$0xf]
        %v171 = vld [vmem:[%s1 + $0xc] sm:$0xf]
        %v172 = vld [vmem:[%s1 + $0x10] sm:$0xf]
        %v173 = vld [vmem:[%s2] sm:$0xff]
        %v174 = vld [vmem:[%s2 + $0x8] sm:$0xff]
        %v175 = vld [vmem:[%s2 + $0x10] sm:$0xff]
        %v176 = vld [vmem:[%s2 + $0x18] sm:$0xff]
        %v177 = vld [vmem:[%s2 + $0x20] sm:$0xff]
        %v178 = vld [vmem:[%s2 + $0x28] sm:$0xff]
        %v179 = vld [vmem:[%s2 + $0x30] sm:$0xff]
        %v180 = vld [vmem:[%s2 + $0x38] sm:$0xff]
        %v181 = vlaneseq
        %v182 = vand.u32 %v181, 127
        %vm183 = vcmp.lt.s32.totalorder %v182, 0
        %v184 = vsub.s32 0, %v182
        %v185 = vsel %vm183, %v184, %v182
        %v186 = vshrl.u32 %v185, 4
        %v187 = vand.u32 %v185, 15
        %v188 = vsub.s32 0, %v187
        %v189 = vsel %vm183, %v188, %v187
        %vm190 = vcmp.ne.s32.totalorder %v189, 0
        %vm191 = vcmp.lt.s32.totalorder %v189, 0
        %vm192 = vmand %vm191, %vm190
        %v193 = vadd.s32 %v189, 16
        %v194 = vsel %vm192, %v193, %v189
        %195 = vrot.lane.b32.xlu0 %v167, 1
        %v196 = vpop.permute.xlu0 %195
        %v197 = vadd.s32 %v194, 4294967295
        %vm198 = vcmp.ge.s32.totalorder %v197, 0
        %vm199 = vcmp.lt.s32.totalorder %v197, 16
        %vm200 = vmand %vm198, %vm199
        %v201 = vsel %vm200, 1, 0
        %vm202 = vcmp.eq.s32.totalorder %v201, 1
        %v203 = vsel %vm202, %v196, 0.0
        %204 = vrot.lane.b32.xlu0 %v167, 127
        %v205 = vpop.permute.xlu0 %204
        %v206 = vadd.s32 %v194, 1
        %vm207 = vcmp.ge.s32.totalorder %v206, 0
        %vm208 = vcmp.lt.s32.totalorder %v206, 16
        %vm209 = vmand %vm207, %vm208
        %v210 = vsel %vm209, 1, 0
        %vm211 = vcmp.eq.s32.totalorder %v210, 1
        %v212 = vsel %vm211, %v205, 0.0
        %v213 = vpack.c.bf16 %v167, %v203
        %v214 = vpack.c.bf16 %v212, %v212
        %v217 = vunpack.c.l.b16 %v168
        %v218 = vunpack.c.l.b16 %v169
        %v219 = vpack.c.b16 %v218, %v217
        %vm220 = vcmask 195584
        %v222 = vsel %vm220, %v219, 0
        %vm224 = vcmask 1043456
        %v226 = vsel %vm224, %v214, 0
        %228 = vmatprep.subr.bf16.mxu0 0
        %229 = vmatpush1.bf16.msra.mxu0 %v213
        %230 = vmatprep.subr.bf16.mxu0 0
        %231 = vmatpush1.bf16.msra.mxu0 %v226
        %232 = vmatprep.subr.bf16.mxu0 0
        %233 = vmatpush1.bf16.msra.mxu0 0
        %234 = vmatprep.subr.bf16.mxu0 0
        %235 = vmatpush1.bf16.msra.mxu0 0
        %236 = vmatprep.subr.bf16.mxu0 0
        %237 = vmatpush1.bf16.msra.mxu0 0
        %238 = vmatprep.subr.bf16.mxu0 0
        %239 = vmatpush1.bf16.msra.mxu0 0
        %240 = vmatprep.subr.bf16.mxu0 0
        %241 = vmatpush1.bf16.msra.mxu0 0
        %242 = vmatprep.subr.bf16.mxu0 0
        %243 = vmatpush1.bf16.msra.mxu0 0
        %244 = vmatprep.subr.bf16.mxu0 0
        %245 = vmatpush1.bf16.msra.mxu0 0
        %246 = vmatprep.subr.bf16.mxu0 0
        %247 = vmatpush1.bf16.msra.mxu0 0
        %248 = vmatprep.subr.bf16.mxu0 0
        %249 = vmatpush1.bf16.msra.mxu0 0
        %250 = vmatprep.subr.bf16.mxu0 0
        %251 = vmatpush1.bf16.msra.mxu0 0
        %252 = vmatprep.subr.bf16.mxu0 0
        %253 = vmatpush1.bf16.msra.mxu0 0
        %254 = vmatprep.subr.bf16.mxu0 0
        %255 = vmatpush1.bf16.msra.mxu0 0
        %256 = vmatprep.subr.bf16.mxu0 0
        %257 = vmatpush1.bf16.msra.mxu0 0
        %258 = vmatprep.subr.bf16.mxu0 0
        %259 = vmatpush1.bf16.msra.mxu0 0
        %260 = vmatprep.mubr.bf16.mxu0 0
        %261 = vmatmul.mubr.bf16.gmra.mrb[0].mxu0 %v222
        %v262 = vpop.f32.mrb[0].mxu0
        %v263 = vadd.f32 0.0, %v262
        %v264 = vpop.f32.mrb[0].mxu0
        %v265 = vpop.f32.mrb[0].mxu0
        %v266 = vadd.f32 0.0, %v265
        %v267 = vpop.f32.mrb[0].mxu0
        %268 = vdwg.mxu0
        %v269 = vadd.f32 %v263, %v266
        %v270 = vrot.slane %v269, 4
        %v271 = vadd.f32 %v269, %v270
        %v272 = vrot.slane %v271, 2
        %v273 = vadd.f32 %v271, %v272
        %v274 = vrot.slane %v273, 1
        %v275 = vadd.f32 %v273, %v274
        %v276 = vrcp.pop 16.0
        %v277 = vmul.f32 %v275, %v276
        %v278 = vsub.f32 %v263, %v277
        %v279 = vsub.f32 %v266, %v277
        %v280 = vmul.f32 %v278, %v278
        %v281 = vmul.f32 %v279, %v279
        %v282 = vadd.f32 %v280, %v281
        %v283 = vrot.slane %v282, 4
        %v284 = vadd.f32 %v282, %v283
        %v285 = vrot.slane %v284, 2
        %v286 = vadd.f32 %v284, %v285
        %v287 = vrot.slane %v286, 1
        %v288 = vadd.f32 %v286, %v287
        %v289 = vmul.f32 %v288, %v276
        %v290 = vadd.f32 %v289, 1e-05
        %v291 = vrsqrt.pop %v290
        %v292 = vmul.f32 %v278, %v291
        %v293 = vmul.f32 %v279, %v291
        %295 = vset.pattern.permute.xlu0 0
        %296 = vperm.xlu0 %295, %v173
        %v297 = vpop.permute.xlu0 %296
        %300 = vset.pattern.permute.xlu0 0
        %301 = vperm.xlu0 %300, %v174
        %v302 = vpop.permute.xlu0 %301
        %v304 = vmul.f32 %v292, %v297
        %v305 = vmul.f32 %v293, %v302
        %307 = vset.pattern.permute.xlu0 0
        %308 = vperm.xlu0 %307, %v175
        %v309 = vpop.permute.xlu0 %308
        %312 = vset.pattern.permute.xlu0 0
        %313 = vperm.xlu0 %312, %v176
        %v314 = vpop.permute.xlu0 %313
        %v316 = vadd.f32 %v304, %v309
        %v317 = vadd.f32 %v305, %v314
        %vm318 = vcmp.ge.f32.partialorder %v316, 0.0
        %vm319 = vcmp.ge.f32.partialorder %v317, 0.0
        %v320 = vmul.f32 %v316, 0.01
        %v321 = vmul.f32 %v317, 0.01
        %v322 = vsel %vm318, %v316, %v320
        %v323 = vsel %vm319, %v317, %v321
        %324 = vrot.lane.b32.xlu0 %v322, 1
        %v325 = vpop.permute.xlu0 %324
        %326 = vrot.lane.b32.xlu0 %v323, 1
        %v327 = vpop.permute.xlu0 %326
        %v328 = vsel %vm202, %v325, 0.0
        %v329 = vsel %vm202, %v327, 0.0
        %330 = vrot.lane.b32.xlu0 %v322, 127
        %v331 = vpop.permute.xlu0 %330
        %332 = vrot.lane.b32.xlu0 %v323, 127
        %v333 = vpop.permute.xlu0 %332
        %v334 = vsel %vm211, %v331, 0.0
        %v335 = vsel %vm211, %v333, 0.0
        %v336 = vpack.c.bf16 %v329, %v328
        %v337 = vpack.c.bf16 %v323, %v322
        %v338 = vpack.c.bf16 %v335, %v334
        %v341 = vunpack.c.l.b16 %v170
        %v342 = vunpack.c.l.b16 %v171
        %v343 = vpack.c.b16 %v342, %v341
        %vm344 = vcmask 392192
        %v346 = vsel %vm344, %v343, 0
        %348 = vmatprep.subr.bf16.mxu0 0
        %349 = vmatpush1.bf16.msra.mxu0 %v336
        %350 = vmatprep.subr.bf16.mxu0 0
        %351 = vmatpush1.bf16.msra.mxu0 %v337
        %352 = vmatprep.subr.bf16.mxu0 0
        %353 = vmatpush1.bf16.msra.mxu0 %v338
        %354 = vmatprep.subr.bf16.mxu0 0
        %355 = vmatpush1.bf16.msra.mxu0 0
        %356 = vmatprep.subr.bf16.mxu0 0
        %357 = vmatpush1.bf16.msra.mxu0 0
        %358 = vmatprep.subr.bf16.mxu0 0
        %359 = vmatpush1.bf16.msra.mxu0 0
        %360 = vmatprep.subr.bf16.mxu0 0
        %361 = vmatpush1.bf16.msra.mxu0 0
        %362 = vmatprep.subr.bf16.mxu0 0
        %363 = vmatpush1.bf16.msra.mxu0 0
        %364 = vmatprep.subr.bf16.mxu0 0
        %365 = vmatpush1.bf16.msra.mxu0 0
        %366 = vmatprep.subr.bf16.mxu0 0
        %367 = vmatpush1.bf16.msra.mxu0 0
        %368 = vmatprep.subr.bf16.mxu0 0
        %369 = vmatpush1.bf16.msra.mxu0 0
        %370 = vmatprep.subr.bf16.mxu0 0
        %371 = vmatpush1.bf16.msra.mxu0 0
        %372 = vmatprep.subr.bf16.mxu0 0
        %373 = vmatpush1.bf16.msra.mxu0 0
        %374 = vmatprep.subr.bf16.mxu0 0
        %375 = vmatpush1.bf16.msra.mxu0 0
        %376 = vmatprep.subr.bf16.mxu0 0
        %377 = vmatpush1.bf16.msra.mxu0 0
        %378 = vmatprep.subr.bf16.mxu0 0
        %379 = vmatpush1.bf16.msra.mxu0 0
        %380 = vmatprep.mubr.bf16.mxu0 0
        %381 = vmatmul.mubr.bf16.gmra.mrb[0].mxu0 %v346
        %v382 = vpop.f32.mrb[0].mxu0
        %v383 = vadd.f32 0.0, %v382
        %v384 = vpop.f32.mrb[0].mxu0
        %v385 = vpop.f32.mrb[0].mxu0
        %v386 = vadd.f32 0.0, %v385
        %v387 = vpop.f32.mrb[0].mxu0
        %388 = vdwg.mxu0
        %v389 = vadd.f32 %v383, %v386
        %v390 = vrot.slane %v389, 4
        %v391 = vadd.f32 %v389, %v390
        %v392 = vrot.slane %v391, 2
        %v393 = vadd.f32 %v391, %v392
        %v394 = vrot.slane %v393, 1
        %v395 = vadd.f32 %v393, %v394
        %v396 = vmul.f32 %v395, %v276
        %v397 = vsub.f32 %v383, %v396
        %v398 = vsub.f32 %v386, %v396
        %v399 = vmul.f32 %v397, %v397
        %v400 = vmul.f32 %v398, %v398
        %v401 = vadd.f32 %v399, %v400
        %v402 = vrot.slane %v401, 4
        %v403 = vadd.f32 %v401, %v402
        %v404 = vrot.slane %v403, 2
        %v405 = vadd.f32 %v403, %v404
        %v406 = vrot.slane %v405, 1
        %v407 = vadd.f32 %v405, %v406
        %v408 = vmul.f32 %v407, %v276
        %v409 = vadd.f32 %v408, 1e-05
        %v410 = vrsqrt.pop %v409
        %v411 = vmul.f32 %v397, %v410
        %v412 = vmul.f32 %v398, %v410
        %414 = vset.pattern.permute.xlu0 0
        %415 = vperm.xlu0 %414, %v177
        %v416 = vpop.permute.xlu0 %415
        %419 = vset.pattern.permute.xlu0 0
        %420 = vperm.xlu0 %419, %v178
        %v421 = vpop.permute.xlu0 %420
        %v423 = vmul.f32 %v411, %v416
        %v424 = vmul.f32 %v412, %v421
        %426 = vset.pattern.permute.xlu0 0
        %427 = vperm.xlu0 %426, %v179
        %v428 = vpop.permute.xlu0 %427
        %431 = vset.pattern.permute.xlu0 0
        %432 = vperm.xlu0 %431, %v180
        %v433 = vpop.permute.xlu0 %432
        %v435 = vadd.f32 %v423, %v428
        %v436 = vadd.f32 %v424, %v433
        %vm437 = vcmp.ge.f32.partialorder %v435, 0.0
        %vm438 = vcmp.ge.f32.partialorder %v436, 0.0
        %v439 = vmul.f32 %v435, 0.01
        %v440 = vmul.f32 %v436, 0.01
        %v441 = vsel %vm437, %v435, %v439
        %v442 = vsel %vm438, %v436, %v440
        %443 = vrot.lane.b32.xlu0 %v441, 1
        %v444 = vpop.permute.xlu0 %443
        %445 = vrot.lane.b32.xlu0 %v442, 1
        %v446 = vpop.permute.xlu0 %445
        %v447 = vsel %vm202, %v444, 0.0
        %v448 = vsel %vm202, %v446, 0.0
        %449 = vrot.lane.b32.xlu0 %v441, 127
        %v450 = vpop.permute.xlu0 %449
        %451 = vrot.lane.b32.xlu0 %v442, 127
        %v452 = vpop.permute.xlu0 %451
        %v453 = vsel %vm211, %v450, 0.0
        %v454 = vsel %vm211, %v452, 0.0
        %v455 = vpack.c.bf16 %v448, %v447
        %v456 = vpack.c.bf16 %v442, %v441
        %v457 = vpack.c.bf16 %v454, %v453
        %v459 = vsel %vm344, %v172, 0
        %461 = vmatprep.subr.bf16.mxu0 0
        %462 = vmatpush1.bf16.msra.mxu0 %v455
        %463 = vmatprep.subr.bf16.mxu0 0
        %464 = vmatpush1.bf16.msra.mxu0 %v456
        %465 = vmatprep.subr.bf16.mxu0 0
        %466 = vmatpush1.bf16.msra.mxu0 %v457
        %467 = vmatprep.subr.bf16.mxu0 0
        %468 = vmatpush1.bf16.msra.mxu0 0
        %469 = vmatprep.subr.bf16.mxu0 0
        %470 = vmatpush1.bf16.msra.mxu0 0
        %471 = vmatprep.subr.bf16.mxu0 0
        %472 = vmatpush1.bf16.msra.mxu0 0
        %473 = vmatprep.subr.bf16.mxu0 0
        %474 = vmatpush1.bf16.msra.mxu0 0
        %475 = vmatprep.subr.bf16.mxu0 0
        %476 = vmatpush1.bf16.msra.mxu0 0
        %477 = vmatprep.subr.bf16.mxu0 0
        %478 = vmatpush1.bf16.msra.mxu0 0
        %479 = vmatprep.subr.bf16.mxu0 0
        %480 = vmatpush1.bf16.msra.mxu0 0
        %481 = vmatprep.subr.bf16.mxu0 0
        %482 = vmatpush1.bf16.msra.mxu0 0
        %483 = vmatprep.subr.bf16.mxu0 0
        %484 = vmatpush1.bf16.msra.mxu0 0
        %485 = vmatprep.subr.bf16.mxu0 0
        %486 = vmatpush1.bf16.msra.mxu0 0
        %487 = vmatprep.subr.bf16.mxu0 0
        %488 = vmatpush1.bf16.msra.mxu0 0
        %489 = vmatprep.subr.bf16.mxu0 0
        %490 = vmatpush1.bf16.msra.mxu0 0
        %491 = vmatprep.subr.bf16.mxu0 0
        %492 = vmatpush1.bf16.msra.mxu0 0
        %493 = vmatprep.mubr.bf16.mxu0 0
        %494 = vmatmul.mubr.bf16.gmra.mrb[0].mxu0 %v459
        %v495 = vpop.f32.mrb[0].mxu0
        %v496 = vadd.f32 0.0, %v495
        %v497 = vpop.f32.mrb[0].mxu0
        %v498 = vpop.f32.mrb[0].mxu0
        %v499 = vpop.f32.mrb[0].mxu0
        %500 = vdwg.mxu0
        %501 = vst [vmem:[%s161] sm:$0xff] %v496
        %s502 = sand.u32 %s93, 1
        %s503 = scalar_lea.sflag [#allocation3], %s502
        %s504 = sand.u32 %s93, 1
        %s505 = smul.addr %s504, 8
        %s506 = scalar_lea.vmem [#allocation2], %s505
        // Predicated region
        $region33: #{tpu_custom_call.1} parent=31 // pred_check
          %p507 = pneg %p103
        $region34: #{tpu_custom_call.1} parent=31 // pred_check_branch
          %509 = sbr.rel (%p507) target = $region36
        $region35: #{tpu_custom_call.1} parent=31 // pred_region
          %s511 = ssub.s32 128, 128
          %512 = vsyncadd %s503, %s511
          %s513 = smul.addr %s17, 128
          %s514 = scalar_lea.hbm %s3, %s513
          %s516 = sshll.u32 %s506, 4
          %s517 = int_to_ptr.vmem [resolvable:$true] %s516
          %519 = dma.vmem_to_hbm [thread:$0]  %s517, 128, %s514, %s503
        $region36: #{tpu_custom_call.1} parent=31 // pred_fallthru
          _
      $region32: #{tpu_custom_call.1} parent=5 // pred_fallthru
        _
      %p520 = scmp.le.s32.totalorder 2, %s12
      // Predicated region
      $region37: #{tpu_custom_call.1} parent=5 // pred_check
        %p521 = pneg %p520
      $region38: #{tpu_custom_call.1} parent=5 // pred_check_branch
        %523 = sbr.rel (%p521) target = $region40
      $region39: #{tpu_custom_call.1} parent=5 // pred_region
        %s524 = ssub.s32 %s12, 2
        // Predicated region
        $region41: #{tpu_custom_call.1} parent=39 // pred_check
          %p525 = pneg %p109
        $region42: #{tpu_custom_call.1} parent=39 // pred_check_branch
          %527 = sbr.rel (%p525) target = $region44
        $region43: #{tpu_custom_call.1} parent=39 // pred_region
          %s528 = sand.u32 %s94, 1
          %s529 = scalar_lea.sflag [#allocation3], %s528
          %s530 = sand.u32 %s94, 1
          %s531 = smul.addr %s530, 8
          %s532 = scalar_lea.vmem [#allocation2], %s531
          %533 = dma.done %s529, 128
        $region44: #{tpu_custom_call.1} parent=39 // pred_fallthru
          _
      $region40: #{tpu_custom_call.1} parent=5 // pred_fallthru
        _
    $region6: #{tpu_custom_call.1} parent=1 // loop_footer
      %s16 = sadd.s32 1, %s12
    $region7: #{tpu_custom_call.1} parent=1 // loop_footer_branch
      %11 = sbr.rel target = $region3
    $region8: #{tpu_custom_call.1} parent=1 // loop_exit
      _
    %534 = vsyncpa [#allocation3], 1
    %s535 = scalar_lea.sflag [#allocation3], 1
    %536 = vsyncpa %s535, 1

</llo_original>
